<compile_context>
chip_gen: v5e
topology: v5e:2x2
jax: 0.10.0
libtpu: 0.0.40
codegen_flags: <defaults>
</compile_context>

<pallas_src>
import functools

import jax
import jax.numpy as jnp
from jax.experimental import pallas as pl
from jax.experimental.pallas import tpu as pltpu


def _round_up(x: int, m: int) -> int:
    return ((x + m - 1) // m) * m


def _round_down(x: int, m: int) -> int:
    return (x // m) * m


def _layernorm_rows(y, g, beta, eps):
    """LayerNorm over the last axis with one-pass statistics. y is f32."""
    h = y.shape[-1]
    s = jnp.sum(y, axis=-1, keepdims=True)
    ss = jnp.sum(y * y, axis=-1, keepdims=True)
    mean = s * (1.0 / h)
    var = ss * (1.0 / h) - mean * mean
    inv = jax.lax.rsqrt(var + eps)
    return (y - mean) * inv * g + beta


def _attn_out_kernel(x_ref, res_ref, w_ref, b_ref, g_ref, beta_ref, o_ref, *, eps):
    # Dense: y = x @ W on the MXU (native input dtype, f32 accumulation).
    y = jnp.dot(x_ref[...], w_ref[...], preferred_element_type=jnp.float32)
    # Bias + residual add in f32.
    y = y + b_ref[...] + res_ref[...].astype(jnp.float32)
    # Dropout: nn.Dropout is a no-op in eval/inference mode.
    # TODO(synk): training-mode dropout would use pltpu.prng_seed/prng_random_bits.
    o_ref[...] = _layernorm_rows(y, g_ref[...], beta_ref[...], eps).astype(o_ref.dtype)


def _attn_out_ktiled_kernel(x_ref, res_ref, w_ref, b_ref, g_ref, beta_ref,
                            o_ref, acc_ref, *, eps):
    k = pl.program_id(1)

    @pl.when(k == 0)
    def _():
        acc_ref[...] = jnp.zeros_like(acc_ref)

    acc_ref[...] += jnp.dot(x_ref[...], w_ref[...],
                            preferred_element_type=jnp.float32)

    @pl.when(k == pl.num_programs(1) - 1)
    def _():
        y = acc_ref[...] + b_ref[...] + res_ref[...].astype(jnp.float32)
        # Dropout: eval-mode no-op (see simple-path kernel).
        o_ref[...] = _layernorm_rows(y, g_ref[...], beta_ref[...], eps).astype(
            o_ref.dtype)


def _vmem_budget_bytes() -> int:
    """~75% of physical VMEM: 48 MiB on v7x, 96 MiB on v5e/v6e."""
    try:
        info = pltpu.get_tpu_info()
        cap = int(getattr(info, "vmem_capacity_bytes", 64 * 1024 * 1024))
    except Exception:
        cap = 64 * 1024 * 1024
    return max((cap * 3) // 4, 16 * 1024 * 1024)


def _fit_tm(requested_tm: int, m_cap: int, per_row_bytes: int,
            fixed_bytes: int, budget: int) -> int:
    """Largest row tile (multiple of 8, ideally 256) that fits the budget."""
    avail = max(budget - fixed_bytes, per_row_bytes * 8)
    tm_fit = max(_round_down(avail // per_row_bytes, 8), 8)
    tm = min(_round_up(requested_tm, 8), m_cap, tm_fit)
    if tm >= 256:
        tm = _round_down(tm, 256)  # match v6e/v7x MXU M-edge
    return max(tm, 8)


def attention_output(hidden_states, input_tensor, w, b, gamma, beta,
                     *, eps=1e-12, tile_m=512, force_k_tiled=False):
    """Fused Linear + (eval) dropout + residual + LayerNorm.

    hidden_states, input_tensor: [B, S, H]
    w: [H, H]   (already (in, out), i.e. PyTorch weight.T)
    b, gamma, beta: [H]
    """
    B, S, H = hidden_states.shape
    M = B * S
    out_dtype = hidden_states.dtype

    x2 = hidden_states.reshape(M, H)
    r2 = input_tensor.reshape(M, H)

    # Feed the MXU in the activation dtype (bf16 if activations are bf16);
    # keep LN / affine parameters in f32 for accurate normalization math.
    w_k = w.astype(out_dtype)
    b2 = b.astype(jnp.float32).reshape(1, H)
    g2 = gamma.astype(jnp.float32).reshape(1, H)
    beta2 = beta.astype(jnp.float32).reshape(1, H)

    act_bytes = jnp.dtype(out_dtype).itemsize
    w_bytes = jnp.dtype(w_k.dtype).itemsize

    budget = _vmem_budget_bytes()
    m_cap = _round_up(M, 8)

    # Use the K-tiled accumulation path when the resident [H, H] weight would
    # eat more than half the VMEM budget (large H, esp. on v7x's 64 MiB VMEM).
    use_k_tiled = force_k_tiled or (H * H * w_bytes > budget // 2)

    cost = pl.CostEstimate(
        flops=2 * M * H * H + 10 * M * H,
        transcendentals=M,
        bytes_accessed=3 * M * H * act_bytes + H * H * w_bytes + 3 * H * 4,
    )
    params = pltpu.CompilerParams(
        # Shards the row axis across TensorCores on v7x; no-op on v5e/v6e (1 TC).
        dimension_semantics=("parallel",) if not use_k_tiled
        else ("parallel", "arbitrary"),
        vmem_limit_bytes=budget,
    )
    kern_kwargs = dict(compiler_params=params, cost_estimate=cost,
                       out_shape=jax.ShapeDtypeStruct((M, H), out_dtype))

    if not use_k_tiled:
        # Resident single-buffered weight, 1-D row grid.
        fixed = H * H * w_bytes + 3 * H * 4
        per_row = 6 * H * act_bytes + 8 * H  # 3 streamed arrays x 2 bufs + f32 temps
        tm = _fit_tm(tile_m, m_cap, per_row, fixed, budget)
        grid = (pl.cdiv(M, tm),)  # ragged last block masked by Pallas

        out2 = pl.pallas_call(
            functools.partial(_attn_out_kernel, eps=eps),
            grid_spec=pltpu.PrefetchScalarGridSpec(
                num_scalar_prefetch=0,
                grid=grid,
                in_specs=[
                    pl.BlockSpec((tm, H), lambda i: (i, 0)),   # hidden_states tile
                    pl.BlockSpec((tm, H), lambda i: (i, 0)),   # residual tile
                    # Constant operands: single buffer (saves VMEM, fetched once).
                    pl.BlockSpec((H, H), lambda i: (0, 0),
                                 pipeline_mode=pl.Buffered(1)),  # dense weight
                    pl.BlockSpec((1, H), lambda i: (0, 0),
                                 pipeline_mode=pl.Buffered(1)),  # dense bias
                    pl.BlockSpec((1, H), lambda i: (0, 0),
                                 pipeline_mode=pl.Buffered(1)),  # LN gamma
                    pl.BlockSpec((1, H), lambda i: (0, 0),
                                 pipeline_mode=pl.Buffered(1)),  # LN beta
                ],
                out_specs=pl.BlockSpec((tm, H), lambda i: (i, 0)),
            ),
            **kern_kwargs,
        )(x2, r2, w_k, b2, g2, beta2)
    else:
        # K-tiled accumulation: W streamed in (tk, H) slabs, f32 accumulator.
        tk = H
        for cand in (512, 256, 128):
            if H % cand == 0:
                tk = cand
                break
        fixed = 2 * tk * H * w_bytes + 3 * H * 4
        per_row = 2 * tk * act_bytes + 4 * H * act_bytes + 4 * H + 8 * H
        tm = _fit_tm(tile_m, m_cap, per_row, fixed, budget)
        grid = (pl.cdiv(M, tm), H // tk)

        out2 = pl.pallas_call(
            functools.partial(_attn_out_ktiled_kernel, eps=eps),
            grid_spec=pltpu.PrefetchScalarGridSpec(
                num_scalar_prefetch=0,
                grid=grid,
                in_specs=[
                    pl.BlockSpec((tm, tk), lambda i, k: (i, k)),   # x K-slab
                    pl.BlockSpec((tm, H), lambda i, k: (i, 0)),    # residual tile
                    pl.BlockSpec((tk, H), lambda i, k: (k, 0)),    # weight K-slab
                    pl.BlockSpec((1, H), lambda i, k: (0, 0),
                                 pipeline_mode=pl.Buffered(1)),    # dense bias
                    pl.BlockSpec((1, H), lambda i, k: (0, 0),
                                 pipeline_mode=pl.Buffered(1)),    # LN gamma
                    pl.BlockSpec((1, H), lambda i, k: (0, 0),
                                 pipeline_mode=pl.Buffered(1)),    # LN beta
                ],
                out_specs=pl.BlockSpec((tm, H), lambda i, k: (i, 0)),
                scratch_shapes=[pltpu.VMEM((tm, H), jnp.float32)],
            ),
            **kern_kwargs,
        )(x2, r2, w_k, b2, g2, beta2)

    return out2.reshape(B, S, H)


def _reference(hidden_states, input_tensor, w, b, gamma, beta, eps=1e-12):
    y = jnp.einsum("bsh,hk->bsk", hidden_states, w) + b
    y = y + input_tensor
    mean = jnp.mean(y, axis=-1, keepdims=True)
    var = jnp.mean((y - mean) ** 2, axis=-1, keepdims=True)
    return (y - mean) / jnp.sqrt(var + eps) * gamma + beta


def _make_params(key, H):
    k_w, k_b = jax.random.split(key)
    bound = 1.0 / (H ** 0.5)
    w = jax.random.uniform(k_w, (H, H), minval=-bound, maxval=bound,
                           dtype=jnp.float32)          # (in, out) layout
    b = jax.random.uniform(k_b, (H,), minval=-bound, maxval=bound,
                           dtype=jnp.float32)
    gamma = jnp.ones((H,), dtype=jnp.float32)
    beta = jnp.zeros((H,), dtype=jnp.float32)
    return w, b, gamma, beta


if __name__ == "__main__":
    key = jax.random.PRNGKey(0)
    k_x, k_r, k_p = jax.random.split(key, 3)

    # --- main small test: batch=2, seq=8, hidden=32 -------------------------
    B, S, H = 2, 8, 32
    w, b, gamma, beta = _make_params(k_p, H)
    hidden_states = jax.random.normal(k_x, (B, S, H), dtype=jnp.float32)
    input_tensor = jax.random.normal(k_r, (B, S, H), dtype=jnp.float32)

    out = jax.block_until_ready(
        attention_output(hidden_states, input_tensor, w, b, gamma, beta))
    ref = _reference(hidden_states, input_tensor, w, b, gamma, beta)
    assert out.shape == (B, S, H)
    assert jnp.allclose(out, ref, atol=1e-4, rtol=1e-4), "mismatch vs reference"

    # --- ragged last block (M not divisible by tile_m), multi-step grid -----
    B2, S2 = 3, 100
    hs2 = jax.random.normal(k_x, (B2, S2, H), dtype=jnp.float32)
    it2 = jax.random.normal(k_r, (B2, S2, H), dtype=jnp.float32)
    out2 = jax.block_until_ready(
        attention_output(hs2, it2, w, b, gamma, beta, tile_m=64))
    ref2 = _reference(hs2, it2, w, b, gamma, beta)
    assert jnp.allclose(out2, ref2, atol=1e-4, rtol=1e-4), "mismatch (ragged path)"

    # --- K-tiled accumulation path (forced) with H=256, tk=128 --------------
    B3, S3, H3 = 2, 24, 256
    w3, b3, g3, beta3 = _make_params(k_p, H3)
    hs3 = jax.random.normal(k_x, (B3, S3, H3), dtype=jnp.float32)
    it3 = jax.random.normal(k_r, (B3, S3, H3), dtype=jnp.float32)
    out3 = jax.block_until_ready(
        attention_output(hs3, it3, w3, b3, g3, beta3, tile_m=32,
                         force_k_tiled=True))
    ref3 = _reference(hs3, it3, w3, b3, g3, beta3)
    assert jnp.allclose(out3, ref3, atol=1e-4, rtol=1e-4), "mismatch (k-tiled path)"

    print("KERNEL_OK")
</pallas_src>

<mosaic_0001>
module attributes {stable_mosaic.version = 11 : i64} {
  func.func @_attn_out_kernel(%arg0: i32, %arg1: memref<16x32xf32, #tpu.memory_space<vmem>>, %arg2: memref<16x32xf32, #tpu.memory_space<vmem>>, %arg3: memref<32x32xf32, #tpu.memory_space<vmem>>, %arg4: memref<1x32xf32, #tpu.memory_space<vmem>>, %arg5: memref<1x32xf32, #tpu.memory_space<vmem>>, %arg6: memref<1x32xf32, #tpu.memory_space<vmem>>, %arg7: memref<16x32xf32, #tpu.memory_space<vmem>>) attributes {dimension_semantics = [#tpu.dimension_semantics<parallel>], iteration_bounds = array<i64: 1>, scalar_prefetch = 0 : i64, scratch_operands = 0 : i64, tpu.core_type = #tpu.core_type<tc>, window_params = [{transform_indices = @transform_0, window_bounds = array<i64: 16, 32>}, {transform_indices = @transform_1, window_bounds = array<i64: 16, 32>}, {pipeline_mode = #tpu.pipeline_mode<synchronous>, transform_indices = @transform_2, window_bounds = array<i64: 32, 32>}, {pipeline_mode = #tpu.pipeline_mode<synchronous>, transform_indices = @transform_3, window_bounds = array<i64: 1, 32>}, {pipeline_mode = #tpu.pipeline_mode<synchronous>, transform_indices = @transform_4, window_bounds = array<i64: 1, 32>}, {pipeline_mode = #tpu.pipeline_mode<synchronous>, transform_indices = @transform_5, window_bounds = array<i64: 1, 32>}, {transform_indices = @transform_6, window_bounds = array<i64: 16, 32>}]} {
    %c0 = arith.constant 0 : index
    %c0_0 = arith.constant 0 : index
    %0 = vector.load %arg1[%c0, %c0_0] : memref<16x32xf32, #tpu.memory_space<vmem>>, vector<16x32xf32>
    %c0_1 = arith.constant 0 : index
    %c0_2 = arith.constant 0 : index
    %1 = vector.load %arg3[%c0_1, %c0_2] : memref<32x32xf32, #tpu.memory_space<vmem>>, vector<32x32xf32>
    %cst = arith.constant dense<0.000000e+00> : vector<16x32xf32>
    %2 = tpu.matmul %0, %1, %cst {dimension_numbers = #tpu.dot_dimension_numbers<[1], [0], [0], [1], [0, 0, 1, 1], [], []>} : vector<16x32xf32>, vector<32x32xf32>, vector<16x32xf32> -> vector<16x32xf32>
    %c0_3 = arith.constant 0 : index
    %c0_4 = arith.constant 0 : index
    %3 = vector.load %arg4[%c0_3, %c0_4] : memref<1x32xf32, #tpu.memory_space<vmem>>, vector<1x32xf32>
    %4 = vector.broadcast %3 : vector<1x32xf32> to vector<16x32xf32>
    %5 = arith.addf %2, %4 : vector<16x32xf32>
    %c0_5 = arith.constant 0 : index
    %c0_6 = arith.constant 0 : index
    %6 = vector.load %arg2[%c0_5, %c0_6] : memref<16x32xf32, #tpu.memory_space<vmem>>, vector<16x32xf32>
    %7 = arith.addf %5, %6 : vector<16x32xf32>
    %c0_7 = arith.constant 0 : index
    %c0_8 = arith.constant 0 : index
    %8 = vector.load %arg5[%c0_7, %c0_8] : memref<1x32xf32, #tpu.memory_space<vmem>>, vector<1x32xf32>
    %c0_9 = arith.constant 0 : index
    %c0_10 = arith.constant 0 : index
    %9 = vector.load %arg6[%c0_9, %c0_10] : memref<1x32xf32, #tpu.memory_space<vmem>>, vector<1x32xf32>
    %cst_11 = arith.constant dense<0.000000e+00> : vector<16xf32>
    %10 = vector.multi_reduction <add>, %7, %cst_11 [1] : vector<16x32xf32> to vector<16xf32>
    %11 = vector.shape_cast %10 : vector<16xf32> to vector<16x1xf32>
    %12 = arith.mulf %7, %7 : vector<16x32xf32>
    %cst_12 = arith.constant dense<0.000000e+00> : vector<16xf32>
    %13 = vector.multi_reduction <add>, %12, %cst_12 [1] : vector<16x32xf32> to vector<16xf32>
    %14 = vector.shape_cast %13 : vector<16xf32> to vector<16x1xf32>
    %cst_13 = arith.constant 3.125000e-02 : f32
    %15 = vector.broadcast %cst_13 : f32 to vector<16x1xf32>
    %16 = arith.mulf %11, %15 : vector<16x1xf32>
    %cst_14 = arith.constant 3.125000e-02 : f32
    %17 = vector.broadcast %cst_14 : f32 to vector<16x1xf32>
    %18 = arith.mulf %14, %17 : vector<16x1xf32>
    %19 = arith.mulf %16, %16 : vector<16x1xf32>
    %20 = arith.subf %18, %19 : vector<16x1xf32>
    %cst_15 = arith.constant 9.99999996E-13 : f32
    %21 = vector.broadcast %cst_15 : f32 to vector<16x1xf32>
    %22 = arith.addf %20, %21 : vector<16x1xf32>
    %23 = math.rsqrt %22 : vector<16x1xf32>
    %24 = vector.broadcast %16 : vector<16x1xf32> to vector<16x32xf32>
    %25 = arith.subf %7, %24 : vector<16x32xf32>
    %26 = vector.broadcast %23 : vector<16x1xf32> to vector<16x32xf32>
    %27 = arith.mulf %25, %26 : vector<16x32xf32>
    %28 = vector.broadcast %8 : vector<1x32xf32> to vector<16x32xf32>
    %29 = arith.mulf %27, %28 : vector<16x32xf32>
    %30 = vector.broadcast %9 : vector<1x32xf32> to vector<16x32xf32>
    %31 = arith.addf %29, %30 : vector<16x32xf32>
    %c0_16 = arith.constant 0 : index
    %c0_17 = arith.constant 0 : index
    %32 = vector.load %arg7[%c0_16, %c0_17] : memref<16x32xf32, #tpu.memory_space<vmem>>, vector<16x32xf32>
    tpu.vector_store %arg7[%c0_16, %c0_17], %31 {strides = array<i32>} : memref<16x32xf32, #tpu.memory_space<vmem>>, vector<16x32xf32>,
    return
  }
  func.func @transform_0(%arg0: i32) -> (i32, i32) {
    %c0_i32 = arith.constant 0 : i32
    %c0_i32_0 = arith.constant 0 : i32
    return %arg0, %c0_i32 : i32, i32
  }
  func.func @transform_1(%arg0: i32) -> (i32, i32) {
    %c0_i32 = arith.constant 0 : i32
    %c0_i32_0 = arith.constant 0 : i32
    return %arg0, %c0_i32 : i32, i32
  }
  func.func @transform_2(%arg0: i32) -> (i32, i32) {
    %c0_i32 = arith.constant 0 : i32
    %c0_i32_0 = arith.constant 0 : i32
    %c0_i32_1 = arith.constant 0 : i32
    return %c0_i32, %c0_i32_0 : i32, i32
  }
  func.func @transform_3(%arg0: i32) -> (i32, i32) {
    %c0_i32 = arith.constant 0 : i32
    %c0_i32_0 = arith.constant 0 : i32
    %c0_i32_1 = arith.constant 0 : i32
    return %c0_i32, %c0_i32_0 : i32, i32
  }
  func.func @transform_4(%arg0: i32) -> (i32, i32) {
    %c0_i32 = arith.constant 0 : i32
    %c0_i32_0 = arith.constant 0 : i32
    %c0_i32_1 = arith.constant 0 : i32
    return %c0_i32, %c0_i32_0 : i32, i32
  }
  func.func @transform_5(%arg0: i32) -> (i32, i32) {
    %c0_i32 = arith.constant 0 : i32
    %c0_i32_0 = arith.constant 0 : i32
    %c0_i32_1 = arith.constant 0 : i32
    return %c0_i32, %c0_i32_0 : i32, i32
  }
  func.func @transform_6(%arg0: i32) -> (i32, i32) {
    %c0_i32 = arith.constant 0 : i32
    %c0_i32_0 = arith.constant 0 : i32
    return %arg0, %c0_i32 : i32, i32
  }
}

</mosaic_0001>

<llo_original>
// kernel: tpu_custom_call.1
$region0: #{tpu_custom_call.1}
  #allocation0 [shape = 'u32[]', space=smem, size = 0x4, offset = 0x4, fixed_abs, tag = 'smem constant byte address 0x4 - core index']
  #allocation1 [shape = 'u32[72,128]{1,0:T(1,128)}', space=vmem, size = 0x9000, scoped, tag = 'internal scratch']
  %s0 = inlined_call_operand.hbm [shape: f32[16,32], index: 0, kind: input, shape index: {}]
  %s1 = inlined_call_operand.hbm [shape: f32[16,32], index: 1, kind: input, shape index: {}]
  %s2 = inlined_call_operand.hbm [shape: f32[32,32], index: 2, kind: input, shape index: {}]
  %s3 = inlined_call_operand.vmem [shape: f32[1,32], index: 3, kind: input, shape index: {}]
  %s4 = inlined_call_operand.vmem [shape: f32[1,32], index: 4, kind: input, shape index: {}]
  %s5 = inlined_call_operand.vmem [shape: f32[1,32], index: 5, kind: input, shape index: {}]
  %s6 = inlined_call_operand.hbm [shape: f32[16,32], index: 6, kind: output, shape index: {}]
  %s7 = sld [smem:[#allocation0]]
  $region46: #{tpu_custom_call.1} parent=0
    _
  %s9 = ssub.s32 1, %s7
  %s10 = scalar_select 0, %s9, %s7
  $region1: #{tpu_custom_call.1} parent=0
    #allocation2 [shape = 'u8[8192]{0}', space=vmem, size = 0x2000, scoped, tag = 'input window, operand 0, single buffered']
    #allocation3 [shape = 's32[1]{0}', space=sflag, size = 0x4, scoped, tag = 'scoped memory for tpu_custom_call.1']
    #allocation4 [shape = 's32[1]{0}', space=sflag, size = 0x4, scoped, tag = 'scoped memory for tpu_custom_call.1']
    #allocation5 [shape = 'u8[8192]{0}', space=vmem, size = 0x2000, scoped, tag = 'input window, operand 1, single buffered']
    #allocation6 [shape = 's32[1]{0}', space=sflag, size = 0x4, scoped, tag = 'scoped memory for tpu_custom_call.1']
    #allocation7 [shape = 'u8[16384]{0}', space=vmem, size = 0x4000, scoped, tag = 'input window, operand 2, single buffered']
    #allocation8 [shape = 'u8[8192]{0}', space=vmem, size = 0x2000, scoped, tag = 'output window, operand 0, single buffered']
    %11 = vsyncpa [#allocation3], 0
    %12 = vsyncpa [#allocation6], 0
    %13 = vsyncpa [#allocation4], 0
    // Predicated region
    $region2: #{tpu_custom_call.1} parent=1 // pred_check
      _
    $region3: #{tpu_custom_call.1} parent=1 // pred_check_branch
      %15 = sbr.rel (0) target = $region5
    $region4: #{tpu_custom_call.1} parent=1 // pred_region
      %17 = vsyncadd [#allocation3], 0
      %s18 = sshll.u32 %s0, 4
      %s19 = int_to_ptr.hbm [resolvable:$true] %s18
      %s20 = sshll.u32 [#allocation2], 4
      %s21 = int_to_ptr.vmem [resolvable:$true] %s20
      %26 = dma.hbm_to_vmem [thread:$0]  %s19, 256, %s21, [#allocation3], 128, 128, 8
    $region5: #{tpu_custom_call.1} parent=1 // pred_fallthru
      _
    // Predicated region
    $region6: #{tpu_custom_call.1} parent=1 // pred_check
      _
    $region7: #{tpu_custom_call.1} parent=1 // pred_check_branch
      %28 = sbr.rel (0) target = $region9
    $region8: #{tpu_custom_call.1} parent=1 // pred_region
      %30 = vsyncadd [#allocation6], 0
      %s31 = sshll.u32 %s1, 4
      %s32 = int_to_ptr.hbm [resolvable:$true] %s31
      %s33 = sshll.u32 [#allocation5], 4
      %s34 = int_to_ptr.vmem [resolvable:$true] %s33
      %39 = dma.hbm_to_vmem [thread:$0]  %s32, 256, %s34, [#allocation6], 128, 128, 8
    $region9: #{tpu_custom_call.1} parent=1 // pred_fallthru
      _
    // Predicated region
    $region10: #{tpu_custom_call.1} parent=1 // pred_check
      _
    $region11: #{tpu_custom_call.1} parent=1 // pred_check_branch
      %41 = sbr.rel (0) target = $region13
    $region12: #{tpu_custom_call.1} parent=1 // pred_region
      %43 = vsyncadd [#allocation6], 0
      %s44 = sshll.u32 %s2, 4
      %s45 = int_to_ptr.hbm [resolvable:$true] %s44
      %s46 = sshll.u32 [#allocation7], 4
      %s47 = int_to_ptr.vmem [resolvable:$true] %s46
      %52 = dma.hbm_to_vmem [thread:$0]  %s45, 512, %s47, [#allocation6], 128, 128, 8
    $region13: #{tpu_custom_call.1} parent=1 // pred_fallthru
      _
    // Predicated region
    $region14: #{tpu_custom_call.1} parent=1 // pred_check
      _
    $region15: #{tpu_custom_call.1} parent=1 // pred_check_branch
      %54 = sbr.rel (0) target = $region17
    $region16: #{tpu_custom_call.1} parent=1 // pred_region
      _
    $region17: #{tpu_custom_call.1} parent=1 // pred_fallthru
      _
    // Predicated region
    $region18: #{tpu_custom_call.1} parent=1 // pred_check
      _
    $region19: #{tpu_custom_call.1} parent=1 // pred_check_branch
      %56 = sbr.rel (0) target = $region21
    $region20: #{tpu_custom_call.1} parent=1 // pred_region
      _
    $region21: #{tpu_custom_call.1} parent=1 // pred_fallthru
      _
    // Predicated region
    $region22: #{tpu_custom_call.1} parent=1 // pred_check
      _
    $region23: #{tpu_custom_call.1} parent=1 // pred_check_branch
      %58 = sbr.rel (0) target = $region25
    $region24: #{tpu_custom_call.1} parent=1 // pred_region
      _
    $region25: #{tpu_custom_call.1} parent=1 // pred_fallthru
      _
    // Predicated region
    $region26: #{tpu_custom_call.1} parent=1 // pred_check
      _
    $region27: #{tpu_custom_call.1} parent=1 // pred_check_branch
      %60 = sbr.rel (0) target = $region29
    $region28: #{tpu_custom_call.1} parent=1 // pred_region
      %62 = dma.done [#allocation3], 256
    $region29: #{tpu_custom_call.1} parent=1 // pred_fallthru
      _
    // Predicated region
    $region30: #{tpu_custom_call.1} parent=1 // pred_check
      _
    $region31: #{tpu_custom_call.1} parent=1 // pred_check_branch
      %64 = sbr.rel (0) target = $region33
    $region32: #{tpu_custom_call.1} parent=1 // pred_region
      %66 = dma.done [#allocation6], 256
    $region33: #{tpu_custom_call.1} parent=1 // pred_fallthru
      _
    // Predicated region
    $region34: #{tpu_custom_call.1} parent=1 // pred_check
      _
    $region35: #{tpu_custom_call.1} parent=1 // pred_check_branch
      %68 = sbr.rel (0) target = $region37
    $region36: #{tpu_custom_call.1} parent=1 // pred_region
      %70 = dma.done [#allocation6], 512
    $region37: #{tpu_custom_call.1} parent=1 // pred_fallthru
      _
    %v71 = vld [vmem:[#allocation2] sm:$0xff]
    %v72 = vld [vmem:[#allocation2 + $0x8] sm:$0xff]
    %v73 = vld [vmem:[#allocation7] sm:$0xff]
    %v74 = vld [vmem:[#allocation7 + $0x8] sm:$0xff]
    %v75 = vld [vmem:[#allocation7 + $0x10] sm:$0xff]
    %v76 = vld [vmem:[#allocation7 + $0x18] sm:$0xff]
    %v77 = vld [vmem:[%s3] sm:$0x1]
    %v79 = vperm.slane %v77, 0
    %vm81 = vcmask 261120
    %v83 = vsel %vm81, %v71, 0
    %v86 = vsel %vm81, %v72, 0
    %88 = vmatpush.msra.mxu0 0.0
    %89 = vmatpush.msra.mxu0 0.0
    %90 = vmatpush.msra.mxu0 0.0
    %91 = vmatpush.msra.mxu0 0.0
    %92 = vmatpush.msra.mxu0 0.0
    %93 = vmatpush.msra.mxu0 0.0
    %94 = vmatpush.msra.mxu0 0.0
    %95 = vmatpush.msra.mxu0 0.0
    %96 = vmatpush.msra.mxu0 0.0
    %97 = vmatpush.msra.mxu0 0.0
    %98 = vmatpush.msra.mxu0 0.0
    %99 = vmatpush.msra.mxu0 0.0
    %100 = vmatpush.msra.mxu0 %v76
    %101 = vmatpush.msra.mxu0 %v75
    %102 = vmatpush.msra.mxu0 %v74
    %103 = vmatpush.msra.mxu0 %v73
    %104 = vmatmul.f32.gmra.mxu0 %v83
    %v105 = vpop.f32.mrf.mxu0
    %v106 = vadd.f32 %v79, %v105
    %107 = vmatmul.f32.gmra.mxu0 %v86
    %v108 = vpop.f32.mrf.mxu0
    %v109 = vadd.f32 %v79, %v108
    %110 = vdwg.mxu0
    %v111 = vld [vmem:[#allocation5] sm:$0xff]
    %v112 = vld [vmem:[#allocation5 + $0x8] sm:$0xff]
    %v113 = vadd.f32 %v106, %v111
    %v114 = vadd.f32 %v109, %v112
    %v115 = vld [vmem:[%s4] sm:$0x1]
    %v116 = vld [vmem:[%s5] sm:$0x1]
    %v117 = vsel %vm81, %v113, 0.0
    %118 = vadd.xlane.f32.xlu0 %v117
    %v119 = vpop.xlane.xlu0 %118
    %v120 = vsel %vm81, %v114, 0.0
    %121 = vadd.xlane.f32.xlu0 %v120
    %v122 = vpop.xlane.xlu0 %121
    %v123 = vmul.f32 %v113, %v113
    %v124 = vmul.f32 %v114, %v114
    %v125 = vsel %vm81, %v123, 0.0
    %126 = vadd.xlane.f32.xlu0 %v125
    %v127 = vpop.xlane.xlu0 %126
    %v128 = vsel %vm81, %v124, 0.0
    %129 = vadd.xlane.f32.xlu0 %v128
    %v130 = vpop.xlane.xlu0 %129
    %v131 = vmul.f32 %v119, 0.03125
    %v132 = vmul.f32 %v122, 0.03125
    %v133 = vmul.f32 %v127, 0.03125
    %v134 = vmul.f32 %v130, 0.03125
    %v135 = vmul.f32 %v131, %v131
    %v136 = vmul.f32 %v132, %v132
    %v137 = vsub.f32 %v133, %v135
    %v138 = vsub.f32 %v134, %v136
    %v139 = vadd.f32 %v137, 1e-12
    %v140 = vadd.f32 %v138, 1e-12
    %v141 = vrsqrt.pop %v139
    %v142 = vmul.f32 %v141, %v139
    %v143 = vmul.f32 %v142, %v141
    %v144 = vmul.f32 0.5, %v143
    %v145 = vsub.f32 1.5, %v144
    %v146 = vmul.f32 %v141, %v145
    %vm147 = vweird.f32 %v139
    %vm148 = vweird.f32 %v141
    %vm149 = vmor %vm147, %vm148
    %v150 = vsel %vm149, %v141, %v146
    %v151 = vrsqrt.pop %v140
    %v152 = vmul.f32 %v151, %v140
    %v153 = vmul.f32 %v152, %v151
    %v154 = vmul.f32 0.5, %v153
    %v155 = vsub.f32 1.5, %v154
    %v156 = vmul.f32 %v151, %v155
    %vm157 = vweird.f32 %v140
    %vm158 = vweird.f32 %v151
    %vm159 = vmor %vm157, %vm158
    %v160 = vsel %vm159, %v151, %v156
    %v161 = vsub.f32 %v113, %v131
    %v162 = vsub.f32 %v114, %v132
    %v163 = vmul.f32 %v161, %v150
    %v164 = vmul.f32 %v162, %v160
    %v166 = vperm.slane %v115, 0
    %v168 = vmul.f32 %v163, %v166
    %v169 = vmul.f32 %v164, %v166
    %v171 = vperm.slane %v116, 0
    %v173 = vadd.f32 %v168, %v171
    %v174 = vadd.f32 %v169, %v171
    %175 = vst.msk [vmem:[#allocation8] sm:$0xff] %vm81, %v173
    %176 = vst.msk [vmem:[#allocation8 + $0x8] sm:$0xff] %vm81, %v174
    // Predicated region
    $region38: #{tpu_custom_call.1} parent=1 // pred_check
      _
    $region39: #{tpu_custom_call.1} parent=1 // pred_check_branch
      %178 = sbr.rel (0) target = $region41
    $region40: #{tpu_custom_call.1} parent=1 // pred_region
      %180 = vsyncadd [#allocation4], 0
      %s181 = sshll.u32 [#allocation8], 4
      %s182 = int_to_ptr.vmem [resolvable:$true] %s181
      %s183 = sshll.u32 %s6, 4
      %s184 = int_to_ptr.hbm [resolvable:$true] %s183
      %189 = dma.vmem_to_hbm [thread:$0]  %s182, 256, %s184, [#allocation4], 128, 128, 8
    $region41: #{tpu_custom_call.1} parent=1 // pred_fallthru
      _
    // Predicated region
    $region42: #{tpu_custom_call.1} parent=1 // pred_check
      _
    $region43: #{tpu_custom_call.1} parent=1 // pred_check_branch
      %191 = sbr.rel (0) target = $region45
    $region44: #{tpu_custom_call.1} parent=1 // pred_region
      %193 = dma.done [#allocation4], 256
    $region45: #{tpu_custom_call.1} parent=1 // pred_fallthru
      _
    %194 = vsyncpa [#allocation3], 1
    %195 = vsyncpa [#allocation6], 1
    %196 = vsyncpa [#allocation4], 1

</llo_original>
